<compile_context>
chip_gen: v7x
topology: tpu7x:2x2x1
jax: 0.10.0
libtpu: 0.0.40
codegen_flags: <defaults>
</compile_context>

<pallas_src>
import jax
import jax.numpy as jnp
from jax.experimental import pallas as pl
from jax.experimental.pallas import tpu as pltpu


_LANE = 128


def _cdiv(a, b):
    return -(-a // b)


def _round_up(a, b):
    return _cdiv(a, b) * b


def _vmem_capacity_bytes() -> int:
    """Generation-aware VMEM capacity (v5e/v6e: 128 MiB, v7x: 64 MiB per TC)."""
    try:
        return int(pltpu.get_tpu_info().vmem_capacity_bytes)
    except Exception:
        return 64 * 1024 * 1024  # conservative fallback (v7x per-TC)


def _load_images_kernel(*refs):
    """Cast N uint8 row-tiles to float32 and stack them into the output tile."""
    img_refs, out_ref = refs[:-1], refs[-1]
    for i, img_ref in enumerate(img_refs):          # static unroll over batch
        out_ref[i, :, :] = img_ref[...].astype(jnp.float32)


def _plan_tiling(rows: int, lane: int, n_images: int):
    """Pick (images per pallas_call, tile_rows, vmem_capacity)."""
    vmem_cap = _vmem_capacity_bytes()
    budget = vmem_cap // 4                    # double-buffered working-set target
    row_bytes = 2 * lane * (1 + 4)            # per image-row: u8 in + f32 out, x2 bufs

    # Split very large batches across calls so tiles never collapse below ~256 rows.
    target_tile = min(rows, 256)
    imgs_per_call = max(1, min(n_images, budget // (row_bytes * target_tile)))

    tile = max(1, min(rows, budget // (row_bytes * imgs_per_call), 2048))
    if rows > 4 * 256:
        # >=4 grid steps so both v7x TensorCores get work, but never below 256 rows.
        tile = min(tile, max(256, _round_up(_cdiv(rows, 4), 32)))
    if tile >= rows:
        tile = rows                           # single full block (full-dim exemption)
    else:
        tile = max(32, (tile // 32) * 32)     # uint8 sublane(32) / f32(8) alignment
    return imgs_per_call, tile, vmem_cap


def _load_chunk(flat_images, rows, lane, tile_rows, vmem_cap):
    n = len(flat_images)
    grid = (pl.cdiv(rows, tile_rows),)        # uneven grid: final partial block masked
    return pl.pallas_call(
        _load_images_kernel,
        out_shape=jax.ShapeDtypeStruct((n, rows, lane), jnp.float32),
        grid=grid,
        # All N images advance through the same pipelined row window; the DMA of
        # the next tile overlaps the cast+store of the current one.
        in_specs=[pl.BlockSpec((tile_rows, lane), lambda r: (r, 0))] * n,
        out_specs=pl.BlockSpec((n, tile_rows, lane), lambda r: (0, r, 0)),
        compiler_params=pltpu.CompilerParams(
            dimension_semantics=("parallel",),   # shard row loop across TCs (v7x)
            vmem_limit_bytes=vmem_cap // 2,      # footprint (<= cap/4) + headroom
        ),
        cost_estimate=pl.CostEstimate(           # pure bandwidth op: 1 B in + 4 B out
            flops=0, transcendentals=0, bytes_accessed=5 * n * rows * lane),
    )(*flat_images)


@jax.jit
def load_images(*images):
    """images: N uint8 arrays of identical shape (C, H, W).

    Returns float32 (N, C, H, W)  ==  torch.stack([...]).to(torch.zeros(1)).
    """
    n = len(images)
    c, h, w = images[0].shape
    total = c * h * w

    if total % _LANE == 0:
        rows, lane = total // _LANE, _LANE     # lane-dense view, free reshape, no pad
    else:
        rows, lane = c * h, w                  # natural layout: last dim == full W
    flat = [img.reshape(rows, lane) for img in images]

    imgs_per_call, tile_rows, vmem_cap = _plan_tiling(rows, lane, n)
    chunks = [
        _load_chunk(flat[i:i + imgs_per_call], rows, lane, tile_rows, vmem_cap)
        for i in range(0, n, imgs_per_call)
    ]
    out = chunks[0] if len(chunks) == 1 else jnp.concatenate(chunks, axis=0)
    return out.reshape(n, c, h, w)             # contiguous reshape: no extra pass


if __name__ == "__main__":
    key = jax.random.PRNGKey(0)

    # Primary case: W (and C*H*W) not a multiple of 128 -> natural (C*H, W) path.
    N, C, H, W = 2, 3, 16, 100
    keys = jax.random.split(key, N)
    images = [
        jax.random.randint(k, (C, H, W), 0, 256, dtype=jnp.int32).astype(jnp.uint8)
        for k in keys
    ]
    out = jax.block_until_ready(load_images(*images))
    ref = jnp.stack(images).astype(jnp.float32)
    assert out.shape == (N, C, H, W), out.shape
    assert out.dtype == jnp.float32, out.dtype
    assert jnp.array_equal(out, ref), "mismatch vs reference (misaligned W path)"

    # Aligned fast path: C*H*W % 128 == 0 -> lane-dense (rows, 128) view, no pad.
    N2, C2, H2, W2 = 2, 4, 8, 32
    keys2 = jax.random.split(jax.random.PRNGKey(0), N2)
    images2 = [
        jax.random.randint(k, (C2, H2, W2), 0, 256, dtype=jnp.int32).astype(jnp.uint8)
        for k in keys2
    ]
    out2 = jax.block_until_ready(load_images(*images2))
    ref2 = jnp.stack(images2).astype(jnp.float32)
    assert jnp.array_equal(out2, ref2), "mismatch vs reference (aligned path)"

    print("KERNEL_OK")
</pallas_src>

<mosaic_0001>
module attributes {stable_mosaic.version = 11 : i64} {
  func.func @_load_images_kernel(%arg0: i32, %arg1: memref<48x100xi8, #tpu.memory_space<vmem>>, %arg2: memref<48x100xi8, #tpu.memory_space<vmem>>, %arg3: memref<2x48x100xf32, #tpu.memory_space<vmem>>) attributes {dimension_semantics = [#tpu.dimension_semantics<parallel>], iteration_bounds = array<i64: 1>, scalar_prefetch = 0 : i64, scratch_operands = 0 : i64, tpu.core_type = #tpu.core_type<tc>, window_params = [{transform_indices = @transform_0, window_bounds = array<i64: 48, 100>}, {transform_indices = @transform_1, window_bounds = array<i64: 48, 100>}, {transform_indices = @transform_2, window_bounds = array<i64: 2, 48, 100>}]} {
    %c0 = arith.constant 0 : index
    %c0_0 = arith.constant 0 : index
    %0 = vector.load %arg1[%c0, %c0_0] : memref<48x100xi8, #tpu.memory_space<vmem>>, vector<48x100xi8>
    %1 = arith.uitofp %0 : vector<48x100xi8> to vector<48x100xf32>
    %c0_1 = arith.constant 0 : index
    %c0_2 = arith.constant 0 : index
    %c0_3 = arith.constant 0 : index
    %2 = vector.load %arg3[%c0_1, %c0_2, %c0_3] : memref<2x48x100xf32, #tpu.memory_space<vmem>>, vector<1x48x100xf32>
    %3 = vector.shape_cast %2 : vector<1x48x100xf32> to vector<48x100xf32>
    %4 = vector.shape_cast %1 : vector<48x100xf32> to vector<1x48x100xf32>
    tpu.vector_store %arg3[%c0_1, %c0_2, %c0_3], %4 {strides = array<i32>} : memref<2x48x100xf32, #tpu.memory_space<vmem>>, vector<1x48x100xf32>,
    %c0_4 = arith.constant 0 : index
    %c0_5 = arith.constant 0 : index
    %5 = vector.load %arg2[%c0_4, %c0_5] : memref<48x100xi8, #tpu.memory_space<vmem>>, vector<48x100xi8>
    %6 = arith.uitofp %5 : vector<48x100xi8> to vector<48x100xf32>
    %c1 = arith.constant 1 : index
    %c0_6 = arith.constant 0 : index
    %c0_7 = arith.constant 0 : index
    %7 = vector.load %arg3[%c1, %c0_6, %c0_7] : memref<2x48x100xf32, #tpu.memory_space<vmem>>, vector<1x48x100xf32>
    %8 = vector.shape_cast %7 : vector<1x48x100xf32> to vector<48x100xf32>
    %9 = vector.shape_cast %6 : vector<48x100xf32> to vector<1x48x100xf32>
    tpu.vector_store %arg3[%c1, %c0_6, %c0_7], %9 {strides = array<i32>} : memref<2x48x100xf32, #tpu.memory_space<vmem>>, vector<1x48x100xf32>,
    return
  }
  func.func @transform_0(%arg0: i32) -> (i32, i32) {
    %c0_i32 = arith.constant 0 : i32
    %c0_i32_0 = arith.constant 0 : i32
    return %arg0, %c0_i32 : i32, i32
  }
  func.func @transform_1(%arg0: i32) -> (i32, i32) {
    %c0_i32 = arith.constant 0 : i32
    %c0_i32_0 = arith.constant 0 : i32
    return %arg0, %c0_i32 : i32, i32
  }
  func.func @transform_2(%arg0: i32) -> (i32, i32, i32) {
    %c0_i32 = arith.constant 0 : i32
    %c0_i32_0 = arith.constant 0 : i32
    %c0_i32_1 = arith.constant 0 : i32
    return %c0_i32, %arg0, %c0_i32_0 : i32, i32, i32
  }
}

</mosaic_0001>

<llo_original>
// kernel: load_images.1
$region0: #{load_images.1}
  #allocation0 [shape = 'u32[]', space=smem, size = 0x4, offset = 0x4, fixed_abs, tag = 'smem constant byte address 0x4 - core index']
  #allocation1 [shape = 'u32[144,128]{1,0:T(1,128)}', space=vmem, size = 0x12000, scoped, tag = 'internal scratch']
  %s0 = inlined_call_operand.hbm [shape: u8[48,100], index: 0, kind: input, shape index: {}]
  %s1 = inlined_call_operand.hbm [shape: u8[48,100], index: 1, kind: input, shape index: {}]
  %s2 = inlined_call_operand.hbm [shape: f32[2,48,100], index: 2, kind: output, shape index: {}]
  %s3 = sld [smem:[#allocation0]]
  $region26: #{load_images.1} parent=0
    _
  %s5 = ssub.s32 1, %s3
  %s6 = scalar_select 0, %s5, %s3
  $region1: #{load_images.1} parent=0
    #allocation2 [shape = 'u8[6144]{0}', space=vmem, size = 0x1800, scoped, tag = 'input window, operand 0, single buffered']
    #allocation3 [shape = 's32[1]{0}', space=sflag, size = 0x4, scoped, tag = 'scoped memory for load_images.1']
    #allocation4 [shape = 's32[1]{0}', space=sflag, size = 0x4, scoped, tag = 'scoped memory for load_images.1']
    #allocation5 [shape = 'u8[6144]{0}', space=vmem, size = 0x1800, scoped, tag = 'input window, operand 1, single buffered']
    #allocation6 [shape = 's32[1]{0}', space=sflag, size = 0x4, scoped, tag = 'scoped memory for load_images.1']
    #allocation7 [shape = 'u8[49152]{0}', space=vmem, size = 0xc000, scoped, tag = 'output window, operand 0, single buffered']
    %7 = vsyncpa [#allocation3], 0
    %8 = vsyncpa [#allocation6], 0
    %9 = vsyncpa [#allocation4], 0
    // Predicated region
    $region2: #{load_images.1} parent=1 // pred_check
      _
    $region3: #{load_images.1} parent=1 // pred_check_branch
      %11 = sbr.rel (0) target = $region5
    $region4: #{load_images.1} parent=1 // pred_region
      %s13 = ssub.s32 192, 192
      %14 = vsyncadd [#allocation3], %s13
      %s15 = sshll.u32 [#allocation2], 4
      %s16 = int_to_ptr.vmem [resolvable:$true] %s15
      %21 = dma.hbm_to_vmem [thread:$0]  %s0, 192, %s16, [#allocation3], 32, 32, 2
    $region5: #{load_images.1} parent=1 // pred_fallthru
      _
    // Predicated region
    $region6: #{load_images.1} parent=1 // pred_check
      _
    $region7: #{load_images.1} parent=1 // pred_check_branch
      %23 = sbr.rel (0) target = $region9
    $region8: #{load_images.1} parent=1 // pred_region
      %s25 = ssub.s32 192, 192
      %26 = vsyncadd [#allocation6], %s25
      %s27 = sshll.u32 [#allocation5], 4
      %s28 = int_to_ptr.vmem [resolvable:$true] %s27
      %33 = dma.hbm_to_vmem [thread:$0]  %s1, 192, %s28, [#allocation6], 32, 32, 2
    $region9: #{load_images.1} parent=1 // pred_fallthru
      _
    // Predicated region
    $region10: #{load_images.1} parent=1 // pred_check
      _
    $region11: #{load_images.1} parent=1 // pred_check_branch
      %35 = sbr.rel (0) target = $region13
    $region12: #{load_images.1} parent=1 // pred_region
      %36 = dma.done [#allocation3], 192
    $region13: #{load_images.1} parent=1 // pred_fallthru
      _
    // Predicated region
    $region14: #{load_images.1} parent=1 // pred_check
      _
    $region15: #{load_images.1} parent=1 // pred_check_branch
      %38 = sbr.rel (0) target = $region17
    $region16: #{load_images.1} parent=1 // pred_region
      %39 = dma.done [#allocation6], 192
    $region17: #{load_images.1} parent=1 // pred_fallthru
      _
    %v40 = vld [vmem:[#allocation2] sm:$0x3]
    %v41 = vld [vmem:[#allocation2 + $0x2] sm:$0x3]
    %v42 = vld [vmem:[#allocation2 + $0x4] sm:$0x3]
    %v43 = vld [vmem:[#allocation2 + $0x6] sm:$0x3]
    %v44 = vld [vmem:[#allocation2 + $0x8] sm:$0x3]
    %v45 = vld [vmem:[#allocation2 + $0xa] sm:$0x3]
    %v46 = vunpack.c.0.s8 %v40
    %v47 = vunpack.c.0.s8 %v41
    %v48 = vunpack.c.0.s8 %v42
    %v49 = vunpack.c.0.s8 %v43
    %v50 = vunpack.c.0.s8 %v44
    %v51 = vunpack.c.0.s8 %v45
    %v52 = vand.u32 %v46, 255
    %v53 = vand.u32 %v47, 255
    %v54 = vand.u32 %v48, 255
    %v55 = vand.u32 %v49, 255
    %v56 = vand.u32 %v50, 255
    %v57 = vand.u32 %v51, 255
    %v58 = vcvt.s32.f32 %v52
    %v59 = vcvt.s32.f32 %v53
    %v60 = vcvt.s32.f32 %v54
    %v61 = vcvt.s32.f32 %v55
    %v62 = vcvt.s32.f32 %v56
    %v63 = vcvt.s32.f32 %v57
    %vm64 = vcmask 818176
    %65 = vst.msk [vmem:[#allocation7] sm:$0xff] %vm64, %v58
    %66 = vst.msk [vmem:[#allocation7 + $0x8] sm:$0xff] %vm64, %v59
    %67 = vst.msk [vmem:[#allocation7 + $0x10] sm:$0xff] %vm64, %v60
    %68 = vst.msk [vmem:[#allocation7 + $0x18] sm:$0xff] %vm64, %v61
    %69 = vst.msk [vmem:[#allocation7 + $0x20] sm:$0xff] %vm64, %v62
    %70 = vst.msk [vmem:[#allocation7 + $0x28] sm:$0xff] %vm64, %v63
    %v71 = vld [vmem:[#allocation5] sm:$0x3]
    %v72 = vld [vmem:[#allocation5 + $0x2] sm:$0x3]
    %v73 = vld [vmem:[#allocation5 + $0x4] sm:$0x3]
    %v74 = vld [vmem:[#allocation5 + $0x6] sm:$0x3]
    %v75 = vld [vmem:[#allocation5 + $0x8] sm:$0x3]
    %v76 = vld [vmem:[#allocation5 + $0xa] sm:$0x3]
    %v77 = vunpack.c.0.s8 %v71
    %v78 = vunpack.c.0.s8 %v72
    %v79 = vunpack.c.0.s8 %v73
    %v80 = vunpack.c.0.s8 %v74
    %v81 = vunpack.c.0.s8 %v75
    %v82 = vunpack.c.0.s8 %v76
    %v83 = vand.u32 %v77, 255
    %v84 = vand.u32 %v78, 255
    %v85 = vand.u32 %v79, 255
    %v86 = vand.u32 %v80, 255
    %v87 = vand.u32 %v81, 255
    %v88 = vand.u32 %v82, 255
    %v89 = vcvt.s32.f32 %v83
    %v90 = vcvt.s32.f32 %v84
    %v91 = vcvt.s32.f32 %v85
    %v92 = vcvt.s32.f32 %v86
    %v93 = vcvt.s32.f32 %v87
    %v94 = vcvt.s32.f32 %v88
    %s95 = scalar_lea.vmem [#allocation7], 48
    %96 = vst.msk [vmem:[%s95] sm:$0xff] %vm64, %v89
    %97 = vst.msk [vmem:[%s95 + $0x8] sm:$0xff] %vm64, %v90
    %98 = vst.msk [vmem:[%s95 + $0x10] sm:$0xff] %vm64, %v91
    %99 = vst.msk [vmem:[%s95 + $0x18] sm:$0xff] %vm64, %v92
    %100 = vst.msk [vmem:[%s95 + $0x20] sm:$0xff] %vm64, %v93
    %101 = vst.msk [vmem:[%s95 + $0x28] sm:$0xff] %vm64, %v94
    // Predicated region
    $region18: #{load_images.1} parent=1 // pred_check
      _
    $region19: #{load_images.1} parent=1 // pred_check_branch
      %103 = sbr.rel (0) target = $region21
    $region20: #{load_images.1} parent=1 // pred_region
      %s105 = ssub.s32 1536, 1536
      %106 = vsyncadd [#allocation4], %s105
      %s107 = sshll.u32 [#allocation7], 4
      %s108 = int_to_ptr.vmem [resolvable:$true] %s107
      %113 = dma.vmem_to_hbm [thread:$0]  %s108, 1536, %s2, [#allocation4], 128, 128, 8
    $region21: #{load_images.1} parent=1 // pred_fallthru
      _
    // Predicated region
    $region22: #{load_images.1} parent=1 // pred_check
      _
    $region23: #{load_images.1} parent=1 // pred_check_branch
      %115 = sbr.rel (0) target = $region25
    $region24: #{load_images.1} parent=1 // pred_region
      %116 = dma.done [#allocation4], 1536
    $region25: #{load_images.1} parent=1 // pred_fallthru
      _
    %117 = vsyncpa [#allocation3], 1
    %118 = vsyncpa [#allocation6], 1
    %119 = vsyncpa [#allocation4], 1

</llo_original>
